<compile_context>
chip_gen: v7x
topology: tpu7x:2x2x1
jax: 0.10.0
libtpu: 0.0.40
codegen_flags: <defaults>
</compile_context>

<pallas_src>
import jax
import jax.numpy as jnp
from jax.experimental import pallas as pl
from jax.experimental.pallas import tpu as pltpu


# ----------------------------------------------------------------------------
# Kernel: single fused per-column affine pass  y = x * S + T
# ----------------------------------------------------------------------------
def _affine_fma_kernel(x_ref, s_ref, t_ref, o_ref):
    # x_ref: (TB, TD)   s_ref/t_ref: (1, TD)   o_ref: (TB, TD)
    x = x_ref[...].astype(jnp.float32)
    o_ref[...] = (x * s_ref[...] + t_ref[...]).astype(o_ref.dtype)


# ----------------------------------------------------------------------------
# Per-generation VMEM budget + tile selection
# ----------------------------------------------------------------------------
def _vmem_budget_bytes():
    cap = 64 << 20  # conservative fallback = v7x per-TC physical VMEM
    try:
        info = pltpu.get_tpu_info()
        cap = int(getattr(info, "vmem_capacity_bytes", cap))
    except Exception:
        pass
    # ~60% of physical, capped; leaves headroom for compiler-internal scratch.
    return int(min((cap * 3) // 5, 96 << 20))


def _choose_tiles(batch, d_total, dtype_bytes, vmem_budget):
    """Pick (tile_b, tile_d). tile_d is a 128-multiple (lane-dense, unmasked vst);
    tile_b is a multiple of 8 (or the full batch extent when batch < 8)."""
    d_aligned = (d_total % 128 == 0)
    # TODO(synk): pad the column axis to a 128 multiple when d_total % 128 != 0.
    td = min(d_total, 16384) if d_aligned else d_total

    if batch >= 8:
        # x and y tiles double-buffered + in-kernel temporaries ~ 6 tile copies.
        max_tb = max(8, (vmem_budget // (6 * td * dtype_bytes)) // 8 * 8)
        tb = max(8, min(512, max_tb, (batch // 8) * 8))
    else:
        tb = batch  # block sublane dim == full array extent (explicitly allowed)

    # Give the grid some depth: pipelining + v7x megacore sharding need >= 2 steps.
    if d_aligned:
        grid_b = pl.cdiv(batch, tb)
        steps_wanted = max(1, -(-4 // grid_b))  # aim for ~4 total grid steps
        td = min(td, max(128, (d_total // steps_wanted) // 128 * 128))
    return tb, td


# ----------------------------------------------------------------------------
# MultiscaleCompositeTransform.forward
# ----------------------------------------------------------------------------
def multiscale_composite_forward(inputs, params, split_dim=1):
    """inputs: (B, C, H, W) NCHW.
    params: list of (s_i, t_i), each shaped like that level's input (C_i, H, W).
    Returns (all_outputs (B, C*H*W), total_logabsdet (B,))."""
    assert split_dim == 1
    B, C, H, W = inputs.shape
    HW = H * W
    n = len(params)

    # Static cascade bookkeeping (torch.chunk: first chunk = ceil(C/2), hidden = floor(C/2)).
    chans = [C]
    for _ in range(n - 1):
        chans.append(chans[-1] // 2)
    offsets, out_widths = [], []
    off = 0
    for i, c in enumerate(chans):
        offsets.append(off)
        ow = ((c + 1) // 2) * HW if i != n - 1 else c * HW
        out_widths.append(ow)
        off += ow
    d_total = C * HW
    assert off == d_total

    for i, (s, t) in enumerate(params):
        assert s.shape == (chans[i], H, W) and t.shape == (chans[i], H, W)

    # ---- fold the cascade into per-column effective (scale, shift) ----
    # Level i covers columns [offsets[i], d_total). Output column j == input column j
    # transformed, in order, by every covering level:
    #   y = (...((x*e0 + t0)*e1 + t1)...)  ==  x*S + T  with S, T composed below.
    # (exp() is hoisted out of the kernel; these are tiny parameter-sized arrays.)
    S = jnp.ones((d_total,), jnp.float32)
    T = jnp.zeros((d_total,), jnp.float32)
    for i, (s, t) in enumerate(params):
        off_i = offsets[i]
        e = jnp.exp(s.reshape(-1).astype(jnp.float32))
        sh = t.reshape(-1).astype(jnp.float32)
        if off_i:
            e = jnp.concatenate([jnp.ones((off_i,), jnp.float32), e])
            sh = jnp.concatenate([jnp.zeros((off_i,), jnp.float32), sh])
        S = S * e
        T = T * e + sh
    S2 = S.reshape(1, d_total)
    T2 = T.reshape(1, d_total)

    x_flat = inputs.reshape(B, d_total)

    budget = _vmem_budget_bytes()
    tb, td = _choose_tiles(B, d_total, jnp.dtype(x_flat.dtype).itemsize, budget)
    grid = (pl.cdiv(B, tb), pl.cdiv(d_total, td))

    y = pl.pallas_call(
        _affine_fma_kernel,
        out_shape=jax.ShapeDtypeStruct((B, d_total), x_flat.dtype),
        grid=grid,
        in_specs=[
            pl.BlockSpec((tb, td), lambda b, d: (b, d)),   # x tile
            pl.BlockSpec((1, td), lambda b, d: (0, d)),    # folded scale
            pl.BlockSpec((1, td), lambda b, d: (0, d)),    # folded shift
        ],
        out_specs=pl.BlockSpec((tb, td), lambda b, d: (b, d)),
        compiler_params=pltpu.CompilerParams(
            dimension_semantics=("parallel", "parallel"),
            vmem_limit_bytes=budget,
        ),
    )(x_flat, S2, T2)

    # logabsdet of the elementwise affine instantiation is data independent: sum of s_i.
    total_lad = jnp.zeros((), jnp.float32)
    for s, _ in params:
        total_lad = total_lad + jnp.sum(s.astype(jnp.float32))
    total_logabsdet = jnp.broadcast_to(total_lad, (B,))

    return y, total_logabsdet


# ----------------------------------------------------------------------------
# Pure-JAX reference (mirrors the PyTorch forward, sequential cascade)
# ----------------------------------------------------------------------------
def _reference_forward(inputs, params, split_dim=1):
    B = inputs.shape[0]
    hiddens = inputs
    all_outputs, total_lad = [], jnp.zeros((B,), jnp.float32)
    n = len(params)
    for i, (s, t) in enumerate(params):
        y = hiddens * jnp.exp(s)[None] + t[None]
        total_lad = total_lad + jnp.sum(s)
        if i != n - 1:
            C = y.shape[split_dim]
            c0 = -(-C // 2)                     # torch.chunk: first chunk = ceil(C/2)
            outputs, hiddens = y[:, :c0], y[:, c0:]
        else:
            outputs = y
        all_outputs.append(outputs.reshape(B, -1))
    return jnp.concatenate(all_outputs, axis=-1), total_lad


if __name__ == "__main__":
    # Small shapes: B=2, C=8, H=W=16; num_transforms=3, split over channels.
    # Cascade channel counts: 8 -> (out 4 | hidden 4) -> (out 2 | hidden 2) -> out 2
    B, C, H, W = 2, 8, 16, 16
    num_transforms = 3

    key = jax.random.PRNGKey(0)
    kx, *kp = jax.random.split(key, 1 + 2 * num_transforms)
    x = jax.random.normal(kx, (B, C, H, W), dtype=jnp.float32)

    chans = [C]
    for _ in range(num_transforms - 1):
        chans.append(chans[-1] // 2)
    params = []
    for i, c in enumerate(chans):
        s = 0.1 * jax.random.normal(kp[2 * i], (c, H, W), dtype=jnp.float32)
        t = 0.1 * jax.random.normal(kp[2 * i + 1], (c, H, W), dtype=jnp.float32)
        params.append((s, t))

    out, lad = multiscale_composite_forward(x, params)
    out, lad = jax.block_until_ready(out), jax.block_until_ready(lad)

    ref_out, ref_lad = _reference_forward(x, params)
    assert out.shape == (B, C * H * W)
    assert lad.shape == (B,)
    assert jnp.allclose(out, ref_out, atol=1e-4, rtol=1e-4)
    assert jnp.allclose(lad, ref_lad, atol=1e-4, rtol=1e-5)

    print("KERNEL_OK")
</pallas_src>

<mosaic_0001>
module attributes {stable_mosaic.version = 11 : i64} {
  func.func @_affine_fma_kernel(%arg0: i32, %arg1: i32, %arg2: memref<2x512xf32, #tpu.memory_space<vmem>>, %arg3: memref<1x512xf32, #tpu.memory_space<vmem>>, %arg4: memref<1x512xf32, #tpu.memory_space<vmem>>, %arg5: memref<2x512xf32, #tpu.memory_space<vmem>>) attributes {dimension_semantics = [#tpu.dimension_semantics<parallel>, #tpu.dimension_semantics<parallel>], iteration_bounds = array<i64: 1, 4>, scalar_prefetch = 0 : i64, scratch_operands = 0 : i64, tpu.core_type = #tpu.core_type<tc>, window_params = [{transform_indices = @transform_0, window_bounds = array<i64: 2, 512>}, {transform_indices = @transform_1, window_bounds = array<i64: 1, 512>}, {transform_indices = @transform_2, window_bounds = array<i64: 1, 512>}, {transform_indices = @transform_3, window_bounds = array<i64: 2, 512>}]} {
    %c0 = arith.constant 0 : index
    %c0_0 = arith.constant 0 : index
    %0 = vector.load %arg2[%c0, %c0_0] : memref<2x512xf32, #tpu.memory_space<vmem>>, vector<2x512xf32>
    %c0_1 = arith.constant 0 : index
    %c0_2 = arith.constant 0 : index
    %1 = vector.load %arg3[%c0_1, %c0_2] : memref<1x512xf32, #tpu.memory_space<vmem>>, vector<1x512xf32>
    %2 = vector.broadcast %1 : vector<1x512xf32> to vector<2x512xf32>
    %3 = arith.mulf %0, %2 : vector<2x512xf32>
    %c0_3 = arith.constant 0 : index
    %c0_4 = arith.constant 0 : index
    %4 = vector.load %arg4[%c0_3, %c0_4] : memref<1x512xf32, #tpu.memory_space<vmem>>, vector<1x512xf32>
    %5 = vector.broadcast %4 : vector<1x512xf32> to vector<2x512xf32>
    %6 = arith.addf %3, %5 : vector<2x512xf32>
    %c0_5 = arith.constant 0 : index
    %c0_6 = arith.constant 0 : index
    %7 = vector.load %arg5[%c0_5, %c0_6] : memref<2x512xf32, #tpu.memory_space<vmem>>, vector<2x512xf32>
    tpu.vector_store %arg5[%c0_5, %c0_6], %6 {strides = array<i32>} : memref<2x512xf32, #tpu.memory_space<vmem>>, vector<2x512xf32>,
    return
  }
  func.func @transform_0(%arg0: i32, %arg1: i32) -> (i32, i32) {
    %c0_i32 = arith.constant 0 : i32
    return %arg0, %arg1 : i32, i32
  }
  func.func @transform_1(%arg0: i32, %arg1: i32) -> (i32, i32) {
    %c0_i32 = arith.constant 0 : i32
    %c0_i32_0 = arith.constant 0 : i32
    return %c0_i32, %arg1 : i32, i32
  }
  func.func @transform_2(%arg0: i32, %arg1: i32) -> (i32, i32) {
    %c0_i32 = arith.constant 0 : i32
    %c0_i32_0 = arith.constant 0 : i32
    return %c0_i32, %arg1 : i32, i32
  }
  func.func @transform_3(%arg0: i32, %arg1: i32) -> (i32, i32) {
    %c0_i32 = arith.constant 0 : i32
    return %arg0, %arg1 : i32, i32
  }
}

</mosaic_0001>

<llo_original>
// kernel: tpu_custom_call.1
$region0: #{tpu_custom_call.1}
  #allocation0 [shape = 'u32[]', space=smem, size = 0x4, offset = 0x4, fixed_abs, tag = 'smem constant byte address 0x4 - core index']
  #allocation1 [shape = 'u32[144,128]{1,0:T(1,128)}', space=vmem, size = 0x12000, scoped, tag = 'internal scratch']
  %s0 = inlined_call_operand.hbm [shape: f32[2,2048], index: 0, kind: input, shape index: {}]
  %s1 = inlined_call_operand.hbm [shape: f32[1,2048], index: 1, kind: input, shape index: {}]
  %s2 = inlined_call_operand.hbm [shape: f32[1,2048], index: 2, kind: input, shape index: {}]
  %s3 = inlined_call_operand.hbm [shape: f32[2,2048], index: 3, kind: output, shape index: {}]
  %s4 = sld [smem:[#allocation0]]
  $region57: #{tpu_custom_call.1} parent=0
    _
  %s6 = ssub.s32 1, %s4
  %s7 = scalar_select 0, %s6, %s4
  $region1: #{tpu_custom_call.1} parent=0
    #allocation2 [shape = 'u8[8192]{0}', space=vmem, size = 0x2000, scoped, tag = 'input window, operand 0']
    #allocation3 [shape = 's32[2]{0}', space=sflag, size = 0x8, scoped, tag = 'scoped memory for tpu_custom_call.1']
    #allocation4 [shape = 's32[2]{0}', space=sflag, size = 0x8, scoped, tag = 'scoped memory for tpu_custom_call.1']
    #allocation5 [shape = 'u8[4096]{0}', space=vmem, size = 0x1000, scoped, tag = 'input window, operand 1']
    #allocation6 [shape = 's32[2]{0}', space=sflag, size = 0x8, scoped, tag = 'scoped memory for tpu_custom_call.1']
    #allocation7 [shape = 'u8[4096]{0}', space=vmem, size = 0x1000, scoped, tag = 'input window, operand 2']
    #allocation8 [shape = 'u8[8192]{0}', space=vmem, size = 0x2000, scoped, tag = 'output window, operand 0']
    %8 = vsyncpa [#allocation3], 0
    %s9 = scalar_lea.sflag [#allocation3], 1
    %10 = vsyncpa %s9, 0
    %11 = vsyncpa [#allocation6], 0
    %s12 = scalar_lea.sflag [#allocation6], 1
    %13 = vsyncpa %s12, 0
    %14 = vsyncpa [#allocation4], 0
    %s15 = scalar_lea.sflag [#allocation4], 1
    %16 = vsyncpa %s15, 0
    loop: start=0, step=1, limit=6
    $region2: #{tpu_custom_call.1} parent=1 // loop_pre_header
      _
    $region3: #{tpu_custom_call.1} parent=1 // loop_header
      %s18 = sphi 0, %s22
      %p19 = scmp.ge.s32.totalorder %s18, 6
      %s25 = sphi 0, %s37
      %s26 = sphi 0, %s33
      %s27 = sphi 0, %s25
      %s28 = sphi 0, %s26
      %s29 = sphi 0, %s27
      %s30 = sphi 0, %s28
      %s42 = sphi 0, %s44
      %s45 = sphi 0, %s42
      %s46 = sphi 0, %s45
      %s62 = sphi 0, %s46
      %s68 = sphi 0, %s70
      %s71 = sphi 0, %s68
      %s72 = sphi 0, %s71
      %s88 = sphi 0, %s72
      %s94 = sphi 0, %s96
      %s97 = sphi 0, %s94
      %s98 = sphi 0, %s97
      %s114 = sphi 0, %s98
      %s122 = sphi 0, %s124
      %s125 = sphi 0, %s122
      %s126 = sphi 0, %s125
      %s142 = sphi 0, %s126
    $region4: #{tpu_custom_call.1} parent=1 // loop_header_branch
      %21 = sbr.rel (%p19) target = $region8
    $region5: #{tpu_custom_call.1} parent=1 // loop_body
      %s23 = ssub.s32 %s18, 1
      %s24 = ssub.s32 %s18, 2
      %s31 = sadd.s32 1, %s26
      %p32 = scmp.ge.s32.totalorder %s31, 4
      %s33 = scalar_select %p32, 0, %s31
      %s34 = sadd.s32 1, %s25
      %s35 = scalar_select %p32, %s34, %s25
      %p36 = scmp.ge.s32.totalorder %s35, 1
      %s37 = scalar_select %p36, 0, %s35
      %s38 = ssub.s32 %s25, %s37
      %s39 = ssub.s32 %s26, %s33
      %s40 = sor.u32 %s38, %s39
      %p41 = scmp.eq.s32.totalorder %s40, 0
      %s43 = sadd.s32 %s42, 1
      %s44 = scalar_select %p41, %s42, %s43
      %p47 = pneg %p41
      %p48 = scmp.eq.s32.totalorder %s18, 3
      %p49 = por %p47, %p48
      %p50 = scmp.ne.s32.totalorder %s42, %s45
      %p51 = scmp.eq.s32.totalorder %s18, 0
      %p52 = por %p50, %p51
      %p53 = scmp.ne.s32.totalorder %s42, %s45
      %p54 = scmp.eq.s32.totalorder %s23, 3
      %p55 = por %p53, %p54
      %p56 = scmp.ne.s32.totalorder %s45, %s46
      %p57 = scmp.eq.s32.totalorder %s23, 0
      %p58 = por %p56, %p57
      %p59 = scmp.ne.s32.totalorder %s45, %s46
      %p60 = scmp.eq.s32.totalorder %s24, 3
      %p61 = por %p59, %p60
      %p63 = scmp.ne.s32.totalorder %s46, %s62
      %p64 = scmp.eq.s32.totalorder %s24, 0
      %p65 = por %p63, %p64
      %s66 = ssub.s32 %s26, %s33
      %p67 = scmp.eq.s32.totalorder %s66, 0
      %s69 = sadd.s32 %s68, 1
      %s70 = scalar_select %p67, %s68, %s69
      %p73 = pneg %p67
      %p74 = scmp.eq.s32.totalorder %s18, 3
      %p75 = por %p73, %p74
      %p76 = scmp.ne.s32.totalorder %s68, %s71
      %p77 = scmp.eq.s32.totalorder %s18, 0
      %p78 = por %p76, %p77
      %p79 = scmp.ne.s32.totalorder %s68, %s71
      %p80 = scmp.eq.s32.totalorder %s23, 3
      %p81 = por %p79, %p80
      %p82 = scmp.ne.s32.totalorder %s71, %s72
      %p83 = scmp.eq.s32.totalorder %s23, 0
      %p84 = por %p82, %p83
      %p85 = scmp.ne.s32.totalorder %s71, %s72
      %p86 = scmp.eq.s32.totalorder %s24, 3
      %p87 = por %p85, %p86
      %p89 = scmp.ne.s32.totalorder %s72, %s88
      %p90 = scmp.eq.s32.totalorder %s24, 0
      %p91 = por %p89, %p90
      %s92 = ssub.s32 %s26, %s33
      %p93 = scmp.eq.s32.totalorder %s92, 0
      %s95 = sadd.s32 %s94, 1
      %s96 = scalar_select %p93, %s94, %s95
      %p99 = pneg %p93
      %p100 = scmp.eq.s32.totalorder %s18, 3
      %p101 = por %p99, %p100
      %p102 = scmp.ne.s32.totalorder %s94, %s97
      %p103 = scmp.eq.s32.totalorder %s18, 0
      %p104 = por %p102, %p103
      %p105 = scmp.ne.s32.totalorder %s94, %s97
      %p106 = scmp.eq.s32.totalorder %s23, 3
      %p107 = por %p105, %p106
      %p108 = scmp.ne.s32.totalorder %s97, %s98
      %p109 = scmp.eq.s32.totalorder %s23, 0
      %p110 = por %p108, %p109
      %p111 = scmp.ne.s32.totalorder %s97, %s98
      %p112 = scmp.eq.s32.totalorder %s24, 3
      %p113 = por %p111, %p112
      %p115 = scmp.ne.s32.totalorder %s98, %s114
      %p116 = scmp.eq.s32.totalorder %s24, 0
      %p117 = por %p115, %p116
      %s118 = ssub.s32 %s25, %s37
      %s119 = ssub.s32 %s26, %s33
      %s120 = sor.u32 %s118, %s119
      %p121 = scmp.eq.s32.totalorder %s120, 0
      %s123 = sadd.s32 %s122, 1
      %s124 = scalar_select %p121, %s122, %s123
      %p127 = pneg %p121
      %p128 = scmp.eq.s32.totalorder %s18, 3
      %p129 = por %p127, %p128
      %p130 = scmp.ne.s32.totalorder %s122, %s125
      %p131 = scmp.eq.s32.totalorder %s18, 0
      %p132 = por %p130, %p131
      %p133 = scmp.ne.s32.totalorder %s122, %s125
      %p134 = scmp.eq.s32.totalorder %s23, 3
      %p135 = por %p133, %p134
      %p136 = scmp.ne.s32.totalorder %s125, %s126
      %p137 = scmp.eq.s32.totalorder %s23, 0
      %p138 = por %p136, %p137
      %p139 = scmp.ne.s32.totalorder %s125, %s126
      %p140 = scmp.eq.s32.totalorder %s24, 3
      %p141 = por %p139, %p140
      %p143 = scmp.ne.s32.totalorder %s126, %s142
      %p144 = scmp.eq.s32.totalorder %s24, 0
      %p145 = por %p143, %p144
      %p146 = scmp.le.s32.totalorder 1, %s18
      %p147 = scmp.lt.s32.totalorder %s18, 5
      %p148 = pnand %p146, %p147
      %p149 = pneg %p148
      // Predicated region
      $region9: #{tpu_custom_call.1} parent=5 // pred_check
        _
      $region10: #{tpu_custom_call.1} parent=5 // pred_check_branch
        %151 = sbr.rel (%p148) target = $region12
      $region11: #{tpu_custom_call.1} parent=5 // pred_region
        %s152 = ssub.s32 %s18, 1
      $region12: #{tpu_custom_call.1} parent=5 // pred_fallthru
        _
      %p153 = scmp.lt.s32.totalorder %s18, 4
      // Predicated region
      $region13: #{tpu_custom_call.1} parent=5 // pred_check
        %p154 = pneg %p153
      $region14: #{tpu_custom_call.1} parent=5 // pred_check_branch
        %156 = sbr.rel (%p154) target = $region16
      $region15: #{tpu_custom_call.1} parent=5 // pred_region
        // Predicated region
        $region17: #{tpu_custom_call.1} parent=15 // pred_check
          %p157 = pneg %p52
        $region18: #{tpu_custom_call.1} parent=15 // pred_check_branch
          %159 = sbr.rel (%p157) target = $region20
        $region19: #{tpu_custom_call.1} parent=15 // pred_region
          %s160 = sand.u32 %s42, 1
          %s161 = scalar_lea.sflag [#allocation3], %s160
          %s162 = sand.u32 %s42, 1
          %s163 = smul.addr %s162, 8
          %s164 = scalar_lea.vmem [#allocation2], %s163
          %s165 = smul.u32 4, %s26
          %s167 = ssub.s32 128, 128
          %168 = vsyncadd %s161, %s167
          %s169 = smul.addr %s25, 16
          %s170 = sadd.s32 %s165, %s169
          %s171 = smul.addr %s170, 32
          %s172 = scalar_lea.hbm %s0, %s171
          %s174 = sshll.u32 %s164, 4
          %s175 = int_to_ptr.vmem [resolvable:$true] %s174
          %177 = dma.hbm_to_vmem [thread:$0]  %s172, 128, %s175, %s161
        $region20: #{tpu_custom_call.1} parent=15 // pred_fallthru
          _
        // Predicated region
        $region21: #{tpu_custom_call.1} parent=15 // pred_check
          %p178 = pneg %p78
        $region22: #{tpu_custom_call.1} parent=15 // pred_check_branch
          %180 = sbr.rel (%p178) target = $region24
        $region23: #{tpu_custom_call.1} parent=15 // pred_region
          %s181 = sand.u32 %s18, 1
          %s182 = scalar_lea.sflag [#allocation6], %s181
          %s183 = sand.u32 %s68, 1
          %s184 = smul.addr %s183, 4
          %s185 = scalar_lea.vmem [#allocation5], %s184
          %s186 = smul.u32 4, %s26
          %s188 = ssub.s32 64, 64
          %189 = vsyncadd %s182, %s188
          %s190 = smul.addr %s186, 16
          %s191 = scalar_lea.hbm %s1, %s190
          %s193 = sshll.u32 %s185, 4
          %s194 = int_to_ptr.vmem [resolvable:$true] %s193
          %196 = dma.hbm_to_vmem [thread:$0]  %s191, 64, %s194, %s182
        $region24: #{tpu_custom_call.1} parent=15 // pred_fallthru
          _
        // Predicated region
        $region25: #{tpu_custom_call.1} parent=15 // pred_check
          %p197 = pneg %p104
        $region26: #{tpu_custom_call.1} parent=15 // pred_check_branch
          %199 = sbr.rel (%p197) target = $region28
        $region27: #{tpu_custom_call.1} parent=15 // pred_region
          %s200 = sand.u32 %s18, 1
          %s201 = scalar_lea.sflag [#allocation6], %s200
          %s202 = sand.u32 %s94, 1
          %s203 = smul.addr %s202, 4
          %s204 = scalar_lea.vmem [#allocation7], %s203
          %s205 = smul.u32 4, %s26
          %s207 = ssub.s32 64, 64
          %208 = vsyncadd %s201, %s207
          %s209 = smul.addr %s205, 16
          %s210 = scalar_lea.hbm %s2, %s209
          %s212 = sshll.u32 %s204, 4
          %s213 = int_to_ptr.vmem [resolvable:$true] %s212
          %215 = dma.hbm_to_vmem [thread:$0]  %s210, 64, %s213, %s201
        $region28: #{tpu_custom_call.1} parent=15 // pred_fallthru
          _
      $region16: #{tpu_custom_call.1} parent=5 // pred_fallthru
        _
      %p216 = scmp.le.s32.totalorder 1, %s18
      %p217 = scmp.lt.s32.totalorder %s18, 5
      %p218 = pnand %p216, %p217
      %p219 = pneg %p218
      // Predicated region
      $region29: #{tpu_custom_call.1} parent=5 // pred_check
        _
      $region30: #{tpu_custom_call.1} parent=5 // pred_check_branch
        %221 = sbr.rel (%p218) target = $region32
      $region31: #{tpu_custom_call.1} parent=5 // pred_region
        %s222 = ssub.s32 %s18, 1
        %s223 = sand.u32 %s45, 1
        %s224 = scalar_lea.sflag [#allocation3], %s223
        %s225 = sand.u32 %s45, 1
        %s226 = smul.addr %s225, 8
        %s227 = scalar_lea.vmem [#allocation2], %s226
        // Predicated region
        $region33: #{tpu_custom_call.1} parent=31 // pred_check
          %p228 = pneg %p58
        $region34: #{tpu_custom_call.1} parent=31 // pred_check_branch
          %230 = sbr.rel (%p228) target = $region36
        $region35: #{tpu_custom_call.1} parent=31 // pred_region
          %231 = dma.done %s224, 128
        $region36: #{tpu_custom_call.1} parent=31 // pred_fallthru
          _
        %s232 = sand.u32 %s23, 1
        %s233 = scalar_lea.sflag [#allocation6], %s232
        %s234 = sand.u32 %s71, 1
        %s235 = smul.addr %s234, 4
        %s236 = scalar_lea.vmem [#allocation5], %s235
        // Predicated region
        $region37: #{tpu_custom_call.1} parent=31 // pred_check
          %p237 = pneg %p84
        $region38: #{tpu_custom_call.1} parent=31 // pred_check_branch
          %239 = sbr.rel (%p237) target = $region40
        $region39: #{tpu_custom_call.1} parent=31 // pred_region
          %240 = dma.done %s233, 64
        $region40: #{tpu_custom_call.1} parent=31 // pred_fallthru
          _
        %s241 = sand.u32 %s23, 1
        %s242 = scalar_lea.sflag [#allocation6], %s241
        %s243 = sand.u32 %s97, 1
        %s244 = smul.addr %s243, 4
        %s245 = scalar_lea.vmem [#allocation7], %s244
        // Predicated region
        $region41: #{tpu_custom_call.1} parent=31 // pred_check
          %p246 = pneg %p110
        $region42: #{tpu_custom_call.1} parent=31 // pred_check_branch
          %248 = sbr.rel (%p246) target = $region44
        $region43: #{tpu_custom_call.1} parent=31 // pred_region
          %249 = dma.done %s242, 64
        $region44: #{tpu_custom_call.1} parent=31 // pred_fallthru
          _
        %s250 = sand.u32 %s45, 1
        %s251 = scalar_lea.sflag [#allocation3], %s250
        %s252 = sand.u32 %s45, 1
        %s253 = smul.addr %s252, 8
        %s254 = scalar_lea.vmem [#allocation2], %s253
        %p255 = pneg %p58
        %p256 = pneg %p55
        %s257 = sand.u32 %s23, 1
        %s258 = scalar_lea.sflag [#allocation6], %s257
        %s259 = sand.u32 %s71, 1
        %s260 = smul.addr %s259, 4
        %s261 = scalar_lea.vmem [#allocation5], %s260
        %p262 = pneg %p84
        %p263 = pneg %p81
        %s264 = sand.u32 %s23, 1
        %s265 = scalar_lea.sflag [#allocation6], %s264
        %s266 = sand.u32 %s97, 1
        %s267 = smul.addr %s266, 4
        %s268 = scalar_lea.vmem [#allocation7], %s267
        %p269 = pneg %p110
        %p270 = pneg %p107
        %p271 = pneg %p138
        %p272 = pneg %p135
        %s273 = sand.u32 %s125, 1
        %s274 = scalar_lea.sflag [#allocation4], %s273
        %s275 = sand.u32 %s125, 1
        %s276 = smul.addr %s275, 8
        %s277 = scalar_lea.vmem [#allocation8], %s276
        %s278 = smul.u32 4, %s28
        %s279 = smul.u32 4, %s28
        %s280 = smul.u32 4, %s28
        %s281 = smul.u32 4, %s28
        %v282 = vld [vmem:[%s227] sm:$0xff]
        %v283 = vld [vmem:[%s236] sm:$0xf]
        %v285 = vlaneseq
        %v286 = vshrl.u32 %v285, 7
        %v287 = vsub.s32 0, %v286
        %v288 = vrot.slane %v283, %v287
        %v289 = vlaneseq
        %v290 = vshrl.u32 %v289, 7
        %v291 = vsub.s32 1, %v290
        %v292 = vrot.slane %v283, %v291
        %v293 = vlaneseq
        %v294 = vshrl.u32 %v293, 7
        %v295 = vsub.s32 2, %v294
        %v296 = vrot.slane %v283, %v295
        %v297 = vlaneseq
        %v298 = vshrl.u32 %v297, 7
        %v299 = vsub.s32 3, %v298
        %v300 = vrot.slane %v283, %v299
        %v301 = vcombine.low %v288, %v292
        %v302 = vcombine.low %v296, %v300
        %v304 = vunpack.c.l.s4 1983009808
        %v305 = vunpack.c.0.s8 %v304
        %v306 = vlaneseq
        %v307 = vshrl.u32 %v306, 7
        %v308 = vsub.s32 %v305, %v307
        %v309 = vrot.slane %v301, %v308
        %v311 = vunpack.c.l.s4 1983009808
        %v312 = vunpack.c.0.s8 %v311
        %v313 = vlaneseq
        %v314 = vshrl.u32 %v313, 7
        %v315 = vsub.s32 %v312, %v314
        %v316 = vrot.slane %v302, %v315
        %v317 = vcombine.low %v309, %v316
        %v319 = vmul.f32 %v282, %v317
        %v320 = vld [vmem:[%s245] sm:$0xf]
        %v322 = vlaneseq
        %v323 = vshrl.u32 %v322, 7
        %v324 = vsub.s32 0, %v323
        %v325 = vrot.slane %v320, %v324
        %v326 = vlaneseq
        %v327 = vshrl.u32 %v326, 7
        %v328 = vsub.s32 1, %v327
        %v329 = vrot.slane %v320, %v328
        %v330 = vlaneseq
        %v331 = vshrl.u32 %v330, 7
        %v332 = vsub.s32 2, %v331
        %v333 = vrot.slane %v320, %v332
        %v334 = vlaneseq
        %v335 = vshrl.u32 %v334, 7
        %v336 = vsub.s32 3, %v335
        %v337 = vrot.slane %v320, %v336
        %v338 = vcombine.low %v325, %v329
        %v339 = vcombine.low %v333, %v337
        %v341 = vunpack.c.l.s4 1983009808
        %v342 = vunpack.c.0.s8 %v341
        %v343 = vlaneseq
        %v344 = vshrl.u32 %v343, 7
        %v345 = vsub.s32 %v342, %v344
        %v346 = vrot.slane %v338, %v345
        %v348 = vunpack.c.l.s4 1983009808
        %v349 = vunpack.c.0.s8 %v348
        %v350 = vlaneseq
        %v351 = vshrl.u32 %v350, 7
        %v352 = vsub.s32 %v349, %v351
        %v353 = vrot.slane %v339, %v352
        %v354 = vcombine.low %v346, %v353
        %v356 = vadd.f32 %v319, %v354
        %357 = vst [vmem:[%s277] sm:$0xff] %v356
        %s358 = sand.u32 %s125, 1
        %s359 = scalar_lea.sflag [#allocation4], %s358
        %s360 = sand.u32 %s125, 1
        %s361 = smul.addr %s360, 8
        %s362 = scalar_lea.vmem [#allocation8], %s361
        // Predicated region
        $region45: #{tpu_custom_call.1} parent=31 // pred_check
          %p363 = pneg %p135
        $region46: #{tpu_custom_call.1} parent=31 // pred_check_branch
          %365 = sbr.rel (%p363) target = $region48
        $region47: #{tpu_custom_call.1} parent=31 // pred_region
          %s366 = smul.u32 4, %s28
          %s368 = ssub.s32 128, 128
          %369 = vsyncadd %s359, %s368
          %s370 = smul.addr %s27, 16
          %s371 = sadd.s32 %s366, %s370
          %s372 = smul.addr %s371, 32
          %s373 = scalar_lea.hbm %s3, %s372
          %s375 = sshll.u32 %s362, 4
          %s376 = int_to_ptr.vmem [resolvable:$true] %s375
          %378 = dma.vmem_to_hbm [thread:$0]  %s376, 128, %s373, %s359
        $region48: #{tpu_custom_call.1} parent=31 // pred_fallthru
          _
      $region32: #{tpu_custom_call.1} parent=5 // pred_fallthru
        _
      %p379 = scmp.le.s32.totalorder 2, %s18
      // Predicated region
      $region49: #{tpu_custom_call.1} parent=5 // pred_check
        %p380 = pneg %p379
      $region50: #{tpu_custom_call.1} parent=5 // pred_check_branch
        %382 = sbr.rel (%p380) target = $region52
      $region51: #{tpu_custom_call.1} parent=5 // pred_region
        %s383 = ssub.s32 %s18, 2
        // Predicated region
        $region53: #{tpu_custom_call.1} parent=51 // pred_check
          %p384 = pneg %p141
        $region54: #{tpu_custom_call.1} parent=51 // pred_check_branch
          %386 = sbr.rel (%p384) target = $region56
        $region55: #{tpu_custom_call.1} parent=51 // pred_region
          %s387 = sand.u32 %s126, 1
          %s388 = scalar_lea.sflag [#allocation4], %s387
          %s389 = sand.u32 %s126, 1
          %s390 = smul.addr %s389, 8
          %s391 = scalar_lea.vmem [#allocation8], %s390
          %392 = dma.done %s388, 128
        $region56: #{tpu_custom_call.1} parent=51 // pred_fallthru
          _
      $region52: #{tpu_custom_call.1} parent=5 // pred_fallthru
        _
    $region6: #{tpu_custom_call.1} parent=1 // loop_footer
      %s22 = sadd.s32 1, %s18
    $region7: #{tpu_custom_call.1} parent=1 // loop_footer_branch
      %17 = sbr.rel target = $region3
    $region8: #{tpu_custom_call.1} parent=1 // loop_exit
      _
    %393 = vsyncpa [#allocation3], 1
    %s394 = scalar_lea.sflag [#allocation3], 1
    %395 = vsyncpa %s394, 1
    %396 = vsyncpa [#allocation6], 1
    %s397 = scalar_lea.sflag [#allocation6], 1
    %398 = vsyncpa %s397, 1
    %399 = vsyncpa [#allocation4], 1
    %s400 = scalar_lea.sflag [#allocation4], 1
    %401 = vsyncpa %s400, 1

</llo_original>
